<compile_context>
chip_gen: v5e
topology: v5e:2x2
jax: 0.10.0
libtpu: 0.0.40
codegen_flags: <defaults>
</compile_context>

<pallas_src>
import jax
import jax.numpy as jnp
from jax.experimental import pallas as pl
from jax.experimental.pallas import tpu as pltpu

H1 = 128    # hidden 1: Linear(D, 128)
H2 = 64     # hidden 2: Linear(128, 64)
H2P = 128   # hidden 2 zero-padded to a full 128-lane tile


# ----------------------------------------------------------------------------
# Kernel
# ----------------------------------------------------------------------------
def content_score_kernel(x_ref, w1_ref, b1_ref, w2_ref, b2_ref, w3r_ref, b3_ref,
                         o_ref, acc_ref):
    k = pl.program_id(1)
    nk = pl.num_programs(1)

    @pl.when(k == 0)
    def _():
        acc_ref[...] = jnp.zeros_like(acc_ref)

    # Layer 1 partial product: acc += x_k @ W1_k   (MXU, f32 accumulation).
    acc_ref[...] += jnp.dot(x_ref[...], w1_ref[...],
                            preferred_element_type=jnp.float32)

    @pl.when(k == nk - 1)
    def _():
        # Layer 1 epilogue: bias + ReLU.  Dropout(0.2) is identity in eval mode.
        h1 = jnp.maximum(acc_ref[...] + b1_ref[...], 0.0)            # (tb, 128) f32

        # Layer 2: Linear(128, 64 -> padded 128) + ReLU (MXU, f32 accumulation).
        w2 = w2_ref[...]
        h2 = jnp.dot(h1.astype(w2.dtype), w2,
                     preferred_element_type=jnp.float32) + b2_ref[...]
        h2 = jnp.maximum(h2, 0.0)                                     # (tb, 128)

        # Layer 3: Linear(64, 1) + Sigmoid, produced lane-dense as a (1, tb)
        # row by contracting the padded W3 row (1, 128) with h2 (tb, 128).
        z = jax.lax.dot_general(w3r_ref[...], h2, (((1,), (1,)), ((), ())),
                                preferred_element_type=jnp.float32)   # (1, tb)
        o_ref[...] = jax.nn.sigmoid(z + b3_ref[0]).astype(o_ref.dtype)


# ----------------------------------------------------------------------------
# Parameter preparation (one-time convert / pad)
# ----------------------------------------------------------------------------
def prepare_params(params, *, use_bf16=True):
    """One-time conversion / zero-padding of torch-layout params for the kernel."""
    w1, b1, w2, b2, w3, b3 = params
    mm_dtype = jnp.bfloat16 if use_bf16 else jnp.float32
    w1m = w1.astype(mm_dtype)                                              # (D, 128)
    b1m = jnp.reshape(b1, (1, H1)).astype(jnp.float32)
    w2m = jnp.zeros((H1, H2P), mm_dtype).at[:, :H2].set(w2.astype(mm_dtype))
    b2m = jnp.zeros((1, H2P), jnp.float32).at[:, :H2].set(jnp.reshape(b2, (1, H2)))
    w3r = jnp.zeros((1, H2P), jnp.float32).at[:, :H2].set(
        jnp.reshape(w3, (1, H2)).astype(jnp.float32))
    b3s = jnp.reshape(b3, (1,)).astype(jnp.float32)
    return w1m, b1m, w2m, b2m, w3r, b3s


# ----------------------------------------------------------------------------
# Tiling / VMEM heuristics
# ----------------------------------------------------------------------------
def _vmem_bytes_estimate(tb, tk, nk, itemsize):
    est = 2 * tb * tk * itemsize                          # x tile (double-buffered)
    est += (1 if nk == 1 else 2) * tk * H1 * itemsize     # W1 tile(s)
    est += H1 * H2P * itemsize                            # W2 (resident)
    est += tb * H1 * 4                                    # layer-1 f32 accumulator
    est += tb * H1 * (4 + itemsize)                       # h1 (f32) + matmul-dtype copy
    est += tb * H2P * 4                                   # h2 (f32)
    est += 2 * tb * 4                                     # (1, tb) output row (2 bufs)
    est += 1 << 20                                        # biases / W3 row / slack
    return est


def _vmem_budget_and_cap():
    """(tiling budget, vmem_limit_bytes cap), branched on the chip generation."""
    try:
        phys = int(getattr(pltpu.get_tpu_info(), "vmem_capacity_bytes", 64 << 20))
    except Exception:
        phys = 64 << 20
    if phys >= (100 << 20):        # v5e / v6e: 128 MiB of VMEM per TensorCore
        return 80 << 20, 96 << 20
    return 40 << 20, 48 << 20      # v7x: 64 MiB per TensorCore (leave scratch headroom)


def _choose_tiling(B, D, itemsize, budget, tb_override=None):
    """Pick (tb, tk): batch tile (lane-dense output width) and layer-1 K tile."""
    def tk_for(tb):
        if _vmem_bytes_estimate(tb, D, 1, itemsize) <= budget:
            return D                                       # full-D block, no K tiling
        t = max(128, (min(D, 4096) // 128) * 128)
        while t >= 128:
            if _vmem_bytes_estimate(tb, t, 2, itemsize) <= budget:
                return t
            t -= 128
        return None

    if tb_override is not None:
        tk = tk_for(tb_override)
        return tb_override, (tk if tk is not None else 128)

    if B < 256:
        tk = tk_for(B)
        return B, (tk if tk is not None else 128)

    cap = max(128, min(1024, (B // 2 // 128) * 128))
    best = None
    for tb in range(cap, 127, -128):                       # largest batch tile first
        tk = tk_for(tb)
        if tk is None:
            continue
        if best is None:
            best = (tb, tk)
        if pl.cdiv(B, tb) % 2 == 0:                        # even grid: balance v7x's 2 TCs
            return tb, tk
    return best if best is not None else (128, min(D, 128))


# ----------------------------------------------------------------------------
# Wrapper
# ----------------------------------------------------------------------------
def content_score(x, params=None, *, prepared=None, use_bf16=True, tb=None, tk=None):
    """x: (B, D) embeddings -> (B, 1) scores in (0, 1).

    Pass `prepared=prepare_params(params)` to reuse converted weights across calls.
    """
    if prepared is None:
        prepared = prepare_params(params, use_bf16=use_bf16)
    w1m, b1m, w2m, b2m, w3r, b3s = prepared
    mm_dtype = w1m.dtype
    itemsize = jnp.dtype(mm_dtype).itemsize

    B, D = x.shape
    assert w1m.shape[0] == D

    budget, vmem_cap = _vmem_budget_and_cap()
    tb_, tk_ = _choose_tiling(B, D, itemsize, budget, tb_override=tb)
    if tk is not None:
        tk_ = tk

    nt = pl.cdiv(B, tb_)
    Bp = nt * tb_
    nk = pl.cdiv(D, tk_)
    Dp = nk * tk_

    # Zero-pad batch / feature dims; padded rows are sliced off, padded feature
    # columns (and W1 rows) are zero so they contribute nothing.
    xm = x.astype(mm_dtype)
    if Bp != B or Dp != D:
        xm = jnp.pad(xm, ((0, Bp - B), (0, Dp - D)))
    w1p = w1m if Dp == D else jnp.pad(w1m, ((0, Dp - D), (0, 0)))

    vmem_est = _vmem_bytes_estimate(tb_, tk_, nk, itemsize)
    vmem_limit = int(min(max(vmem_est + (8 << 20), 32 << 20), vmem_cap))

    def build(single_buffer_resident):
        def resident(shape):
            kw = {}
            if single_buffer_resident:
                kw["pipeline_mode"] = pl.Buffered(1)       # fetched once, one buffer
            return pl.BlockSpec(shape, lambda i, k: (0, 0), **kw)

        w1_kw = {}
        if single_buffer_resident and nk == 1:
            w1_kw["pipeline_mode"] = pl.Buffered(1)        # W1 resident when not K-tiled

        return pl.pallas_call(
            content_score_kernel,
            out_shape=jax.ShapeDtypeStruct((1, Bp), jnp.float32),
            grid_spec=pltpu.PrefetchScalarGridSpec(
                num_scalar_prefetch=0,
                grid=(nt, nk),
                in_specs=[
                    pl.BlockSpec((tb_, tk_), lambda i, k: (i, k)),          # x tile
                    pl.BlockSpec((tk_, H1), lambda i, k: (k, 0), **w1_kw),  # W1 tile
                    resident((1, H1)),                                      # b1
                    resident((H1, H2P)),                                    # W2
                    resident((1, H2P)),                                     # b2
                    resident((1, H2P)),                                     # W3 row
                    pl.BlockSpec(memory_space=pltpu.MemorySpace.SMEM),      # b3 scalar
                ],
                out_specs=pl.BlockSpec((1, tb_), lambda i, k: (0, i)),      # lane-dense
                scratch_shapes=[pltpu.VMEM((tb_, H1), jnp.float32)],        # layer-1 acc
            ),
            compiler_params=pltpu.CompilerParams(
                dimension_semantics=("parallel", "arbitrary"),
                vmem_limit_bytes=vmem_limit,
            ),
        )

    try:
        out = build(True)(xm, w1p, b1m, w2m, b2m, w3r, b3s)
    except Exception:
        # Fallback if this JAX build rejects pl.Buffered on pallas_call in_specs.
        out = build(False)(xm, w1p, b1m, w2m, b2m, w3r, b3s)

    return out.reshape(Bp, 1)[:B]


# ----------------------------------------------------------------------------
# Reference + init (mimics torch Linear defaults)
# ----------------------------------------------------------------------------
def init_params(key, embedding_dim):
    dims = [(embedding_dim, H1), (H1, H2), (H2, 1)]
    params = []
    for fan_in, fan_out in dims:
        kw, kb, key = jax.random.split(key, 3)
        bound = 1.0 / jnp.sqrt(float(fan_in))
        w = jax.random.uniform(kw, (fan_in, fan_out), jnp.float32, -bound, bound)
        b = jax.random.uniform(kb, (1, fan_out), jnp.float32, -bound, bound)
        params += [w, b]
    return tuple(params)


def content_score_ref(x, params):
    w1, b1, w2, b2, w3, b3 = params
    h1 = jnp.maximum(x @ w1 + b1, 0.0)
    h2 = jnp.maximum(h1 @ w2 + b2, 0.0)
    return jax.nn.sigmoid(h2 @ w3 + b3)


if __name__ == "__main__":
    key = jax.random.PRNGKey(0)

    # --- Small case (B=16, D=32): single full-dim tile, grid (1, 1) ----------
    B, D = 16, 32
    kx, kp, key = jax.random.split(key, 3)
    x = jax.random.normal(kx, (B, D), jnp.float32)
    params = init_params(kp, D)
    ref = content_score_ref(x, params)

    out_f32 = jax.block_until_ready(content_score(x, params, use_bf16=False))
    assert out_f32.shape == (B, 1)
    assert jnp.allclose(out_f32, ref, atol=1e-5, rtol=1e-5), "f32 mismatch (small)"

    out_bf16 = jax.block_until_ready(content_score(x, params))  # bf16 default path
    assert out_bf16.shape == (B, 1)
    assert jnp.allclose(out_bf16, ref, atol=2e-2, rtol=2e-2), "bf16 mismatch (small)"

    # --- Tiled + padded case (B=400, D=256): tb=128, padded to 512, grid (4,1)
    B2, D2 = 400, 256
    kx2, kp2, key = jax.random.split(key, 3)
    x2 = jax.random.normal(kx2, (B2, D2), jnp.float32)
    params2 = init_params(kp2, D2)
    ref2 = content_score_ref(x2, params2)

    prepared2 = prepare_params(params2)               # convert weights once, reuse below
    out2 = jax.block_until_ready(content_score(x2, prepared=prepared2))
    out2b = jax.block_until_ready(content_score(x2, prepared=prepared2))  # reused params
    assert out2.shape == (B2, 1)
    assert jnp.allclose(out2, ref2, atol=2e-2, rtol=2e-2), "bf16 mismatch (tiled)"
    assert jnp.allclose(out2, out2b), "prepared-params reuse mismatch"

    out2_f32 = jax.block_until_ready(content_score(x2, params2, use_bf16=False))
    assert jnp.allclose(out2_f32, ref2, atol=1e-3, rtol=1e-3), "f32 mismatch (tiled)"

    # --- Forced K-tiled case (B=64, D=300, tk=128): grid (1, 3), D padded -----
    B3, D3 = 64, 300
    kx3, kp3, key = jax.random.split(key, 3)
    x3 = jax.random.normal(kx3, (B3, D3), jnp.float32)
    params3 = init_params(kp3, D3)
    ref3 = content_score_ref(x3, params3)

    out3 = jax.block_until_ready(content_score(x3, params3, tk=128))
    assert out3.shape == (B3, 1)
    assert jnp.allclose(out3, ref3, atol=2e-2, rtol=2e-2), "bf16 mismatch (K-tiled)"

    out3_f32 = jax.block_until_ready(content_score(x3, params3, use_bf16=False, tk=128))
    assert jnp.allclose(out3_f32, ref3, atol=1e-3, rtol=1e-3), "f32 mismatch (K-tiled)"

    print("KERNEL_OK")
</pallas_src>

<mosaic_0001>
module attributes {stable_mosaic.version = 11 : i64} {
  func.func @content_score_kernel(%arg0: i32, %arg1: i32, %arg2: memref<16x32xf32, #tpu.memory_space<vmem>>, %arg3: memref<32x128xf32, #tpu.memory_space<vmem>>, %arg4: memref<1x128xf32, #tpu.memory_space<vmem>>, %arg5: memref<128x128xf32, #tpu.memory_space<vmem>>, %arg6: memref<1x128xf32, #tpu.memory_space<vmem>>, %arg7: memref<1x128xf32, #tpu.memory_space<vmem>>, %arg8: memref<1xf32, #tpu.memory_space<smem>>, %arg9: memref<1x16xf32, #tpu.memory_space<vmem>>, %arg10: memref<16x128xf32, #tpu.memory_space<vmem>>) attributes {dimension_semantics = [#tpu.dimension_semantics<parallel>, #tpu.dimension_semantics<arbitrary>], iteration_bounds = array<i64: 1, 1>, scalar_prefetch = 0 : i64, scratch_operands = 1 : i64, tpu.core_type = #tpu.core_type<tc>, window_params = [{transform_indices = @transform_0, window_bounds = array<i64: 16, 32>}, {pipeline_mode = #tpu.pipeline_mode<synchronous>, transform_indices = @transform_1, window_bounds = array<i64: 32, 128>}, {pipeline_mode = #tpu.pipeline_mode<synchronous>, transform_indices = @transform_2, window_bounds = array<i64: 1, 128>}, {pipeline_mode = #tpu.pipeline_mode<synchronous>, transform_indices = @transform_3, window_bounds = array<i64: 128, 128>}, {pipeline_mode = #tpu.pipeline_mode<synchronous>, transform_indices = @transform_4, window_bounds = array<i64: 1, 128>}, {pipeline_mode = #tpu.pipeline_mode<synchronous>, transform_indices = @transform_5, window_bounds = array<i64: 1, 128>}, {transform_indices = @transform_6, window_bounds = array<i64: 1>}, {transform_indices = @transform_7, window_bounds = array<i64: 1, 16>}]} {
    %c0_i32 = arith.constant 0 : i32
    %0 = arith.cmpi eq, %arg1, %c0_i32 : i32
    %1 = arith.extui %0 : i1 to i32
    %c0_i32_0 = arith.constant 0 : i32
    %2 = arith.cmpi ne, %1, %c0_i32_0 : i32
    scf.if %2 {
      %cst_10 = arith.constant 0.000000e+00 : f32
      %12 = vector.broadcast %cst_10 : f32 to vector<16x128xf32>
      %c0_11 = arith.constant 0 : index
      %c0_12 = arith.constant 0 : index
      %13 = vector.load %arg10[%c0_11, %c0_12] : memref<16x128xf32, #tpu.memory_space<vmem>>, vector<16x128xf32>
      tpu.vector_store %arg10[%c0_11, %c0_12], %12 {strides = array<i32>} : memref<16x128xf32, #tpu.memory_space<vmem>>, vector<16x128xf32>,
    } else {
    }
    %c0 = arith.constant 0 : index
    %c0_1 = arith.constant 0 : index
    %3 = vector.load %arg10[%c0, %c0_1] : memref<16x128xf32, #tpu.memory_space<vmem>>, vector<16x128xf32>
    %c0_2 = arith.constant 0 : index
    %c0_3 = arith.constant 0 : index
    %4 = vector.load %arg2[%c0_2, %c0_3] : memref<16x32xf32, #tpu.memory_space<vmem>>, vector<16x32xf32>
    %c0_4 = arith.constant 0 : index
    %c0_5 = arith.constant 0 : index
    %5 = vector.load %arg3[%c0_4, %c0_5] : memref<32x128xf32, #tpu.memory_space<vmem>>, vector<32x128xf32>
    %cst = arith.constant dense<0.000000e+00> : vector<16x128xf32>
    %6 = tpu.matmul %4, %5, %cst {dimension_numbers = #tpu.dot_dimension_numbers<[1], [0], [0], [1], [0, 0, 1, 1], [], []>} : vector<16x32xf32>, vector<32x128xf32>, vector<16x128xf32> -> vector<16x128xf32>
    %7 = arith.addf %3, %6 : vector<16x128xf32>
    %c0_6 = arith.constant 0 : index
    %c0_7 = arith.constant 0 : index
    %8 = vector.load %arg10[%c0_6, %c0_7] : memref<16x128xf32, #tpu.memory_space<vmem>>, vector<16x128xf32>
    tpu.vector_store %arg10[%c0_6, %c0_7], %7 {strides = array<i32>} : memref<16x128xf32, #tpu.memory_space<vmem>>, vector<16x128xf32>,
    %c0_i32_8 = arith.constant 0 : i32
    %9 = arith.cmpi eq, %arg1, %c0_i32_8 : i32
    %10 = arith.extui %9 : i1 to i32
    %c0_i32_9 = arith.constant 0 : i32
    %11 = arith.cmpi ne, %10, %c0_i32_9 : i32
    scf.if %11 {
      %c0_10 = arith.constant 0 : index
      %c0_11 = arith.constant 0 : index
      %12 = vector.load %arg10[%c0_10, %c0_11] : memref<16x128xf32, #tpu.memory_space<vmem>>, vector<16x128xf32>
      %c0_12 = arith.constant 0 : index
      %c0_13 = arith.constant 0 : index
      %13 = vector.load %arg4[%c0_12, %c0_13] : memref<1x128xf32, #tpu.memory_space<vmem>>, vector<1x128xf32>
      %14 = vector.broadcast %13 : vector<1x128xf32> to vector<16x128xf32>
      %15 = arith.addf %12, %14 : vector<16x128xf32>
      %cst_14 = arith.constant 0.000000e+00 : f32
      %16 = vector.broadcast %cst_14 : f32 to vector<16x128xf32>
      %17 = arith.maximumf %15, %16 : vector<16x128xf32>
      %c0_15 = arith.constant 0 : index
      %c0_16 = arith.constant 0 : index
      %18 = vector.load %arg5[%c0_15, %c0_16] : memref<128x128xf32, #tpu.memory_space<vmem>>, vector<128x128xf32>
      %cst_17 = arith.constant dense<0.000000e+00> : vector<16x128xf32>
      %19 = tpu.matmul %17, %18, %cst_17 {dimension_numbers = #tpu.dot_dimension_numbers<[1], [0], [0], [1], [0, 0, 1, 1], [], []>} : vector<16x128xf32>, vector<128x128xf32>, vector<16x128xf32> -> vector<16x128xf32>
      %c0_18 = arith.constant 0 : index
      %c0_19 = arith.constant 0 : index
      %20 = vector.load %arg6[%c0_18, %c0_19] : memref<1x128xf32, #tpu.memory_space<vmem>>, vector<1x128xf32>
      %21 = vector.broadcast %20 : vector<1x128xf32> to vector<16x128xf32>
      %22 = arith.addf %19, %21 : vector<16x128xf32>
      %cst_20 = arith.constant 0.000000e+00 : f32
      %23 = vector.broadcast %cst_20 : f32 to vector<16x128xf32>
      %24 = arith.maximumf %22, %23 : vector<16x128xf32>
      %c0_21 = arith.constant 0 : index
      %c0_22 = arith.constant 0 : index
      %25 = vector.load %arg7[%c0_21, %c0_22] : memref<1x128xf32, #tpu.memory_space<vmem>>, vector<1x128xf32>
      %cst_23 = arith.constant dense<0.000000e+00> : vector<1x16xf32>
      %26 = tpu.matmul %25, %24, %cst_23 {dimension_numbers = #tpu.dot_dimension_numbers<[1], [1], [0], [0], [0, 0, 1, 0], [], []>} : vector<1x128xf32>, vector<16x128xf32>, vector<1x16xf32> -> vector<1x16xf32>
      %c0_24 = arith.constant 0 : index
      %27 = memref.load %arg8[%c0_24] : memref<1xf32, #tpu.memory_space<smem>>
      %28 = vector.broadcast %27 : f32 to vector<1x16xf32>
      %29 = arith.addf %26, %28 : vector<1x16xf32>
      %30 = arith.negf %29 : vector<1x16xf32>
      %31 = math.exp %30 : vector<1x16xf32>
      %cst_25 = arith.constant 1.000000e+00 : f32
      %32 = vector.broadcast %cst_25 : f32 to vector<1x16xf32>
      %33 = arith.addf %32, %31 : vector<1x16xf32>
      %34 = arith.divf %32, %33 : vector<1x16xf32>
      %c0_26 = arith.constant 0 : index
      %c0_27 = arith.constant 0 : index
      %35 = vector.load %arg9[%c0_26, %c0_27] : memref<1x16xf32, #tpu.memory_space<vmem>>, vector<1x16xf32>
      tpu.vector_store %arg9[%c0_26, %c0_27], %34 {strides = array<i32>} : memref<1x16xf32, #tpu.memory_space<vmem>>, vector<1x16xf32>,
    } else {
    }
    return
  }
  func.func @transform_0(%arg0: i32, %arg1: i32) -> (i32, i32) {
    %c0_i32 = arith.constant 0 : i32
    return %arg0, %arg1 : i32, i32
  }
  func.func @transform_1(%arg0: i32, %arg1: i32) -> (i32, i32) {
    %c0_i32 = arith.constant 0 : i32
    %c0_i32_0 = arith.constant 0 : i32
    return %arg1, %c0_i32 : i32, i32
  }
  func.func @transform_2(%arg0: i32, %arg1: i32) -> (i32, i32) {
    %c0_i32 = arith.constant 0 : i32
    %c0_i32_0 = arith.constant 0 : i32
    %c0_i32_1 = arith.constant 0 : i32
    return %c0_i32, %c0_i32_0 : i32, i32
  }
  func.func @transform_3(%arg0: i32, %arg1: i32) -> (i32, i32) {
    %c0_i32 = arith.constant 0 : i32
    %c0_i32_0 = arith.constant 0 : i32
    %c0_i32_1 = arith.constant 0 : i32
    return %c0_i32, %c0_i32_0 : i32, i32
  }
  func.func @transform_4(%arg0: i32, %arg1: i32) -> (i32, i32) {
    %c0_i32 = arith.constant 0 : i32
    %c0_i32_0 = arith.constant 0 : i32
    %c0_i32_1 = arith.constant 0 : i32
    return %c0_i32, %c0_i32_0 : i32, i32
  }
  func.func @transform_5(%arg0: i32, %arg1: i32) -> (i32, i32) {
    %c0_i32 = arith.constant 0 : i32
    %c0_i32_0 = arith.constant 0 : i32
    %c0_i32_1 = arith.constant 0 : i32
    return %c0_i32, %c0_i32_0 : i32, i32
  }
  func.func @transform_6(%arg0: i32, %arg1: i32) -> i32 {
    %c0_i32 = arith.constant 0 : i32
    %c0_i32_0 = arith.constant 0 : i32
    return %c0_i32 : i32
  }
  func.func @transform_7(%arg0: i32, %arg1: i32) -> (i32, i32) {
    %c0_i32 = arith.constant 0 : i32
    %c0_i32_0 = arith.constant 0 : i32
    return %c0_i32, %arg0 : i32, i32
  }
}

module attributes {stable_mosaic.version = 11 : i64} {
  func.func @content_score_kernel(%arg0: i32, %arg1: i32, %arg2: memref<16x32xf32, #tpu.memory_space<vmem>>, %arg3: memref<32x128xf32, #tpu.memory_space<vmem>>, %arg4: memref<1x128xf32, #tpu.memory_space<vmem>>, %arg5: memref<128x128xf32, #tpu.memory_space<vmem>>, %arg6: memref<1x128xf32, #tpu.memory_space<vmem>>, %arg7: memref<1x128xf32, #tpu.memory_space<vmem>>, %arg8: memref<1xf32, #tpu.memory_space<smem>>, %arg9: memref<1x16xf32, #tpu.memory_space<vmem>>, %arg10: memref<16x128xf32, #tpu.memory_space<vmem>>) attributes {dimension_semantics = [#tpu.dimension_semantics<parallel>, #tpu.dimension_semantics<arbitrary>], iteration_bounds = array<i64: 1, 1>, scalar_prefetch = 0 : i64, scratch_operands = 1 : i64, tpu.core_type = #tpu.core_type<tc>, window_params = [{transform_indices = @transform_0, window_bounds = array<i64: 16, 32>}, {transform_indices = @transform_1, window_bounds = array<i64: 32, 128>}, {pipeline_mode = #tpu.pipeline_mode<synchronous>, transform_indices = @transform_2, window_bounds = array<i64: 1, 128>}, {pipeline_mode = #tpu.pipeline_mode<synchronous>, transform_indices = @transform_3, window_bounds = array<i64: 128, 128>}, {pipeline_mode = #tpu.pipeline_mode<synchronous>, transform_indices = @transform_4, window_bounds = array<i64: 1, 128>}, {pipeline_mode = #tpu.pipeline_mode<synchronous>, transform_indices = @transform_5, window_bounds = array<i64: 1, 128>}, {transform_indices = @transform_6, window_bounds = array<i64: 1>}, {transform_indices = @transform_7, window_bounds = array<i64: 1, 16>}]} {
    %c0_i32 = arith.constant 0 : i32
    %0 = arith.cmpi eq, %arg1, %c0_i32 : i32
    %1 = arith.extui %0 : i1 to i32
    %c0_i32_0 = arith.constant 0 : i32
    %2 = arith.cmpi ne, %1, %c0_i32_0 : i32
    scf.if %2 {
      %cst_10 = arith.constant 0.000000e+00 : f32
      %12 = vector.broadcast %cst_10 : f32 to vector<16x128xf32>
      %c0_11 = arith.constant 0 : index
      %c0_12 = arith.constant 0 : index
      %13 = vector.load %arg10[%c0_11, %c0_12] : memref<16x128xf32, #tpu.memory_space<vmem>>, vector<16x128xf32>
      tpu.vector_store %arg10[%c0_11, %c0_12], %12 {strides = array<i32>} : memref<16x128xf32, #tpu.memory_space<vmem>>, vector<16x128xf32>,
    } else {
    }
    %c0 = arith.constant 0 : index
    %c0_1 = arith.constant 0 : index
    %3 = vector.load %arg10[%c0, %c0_1] : memref<16x128xf32, #tpu.memory_space<vmem>>, vector<16x128xf32>
    %c0_2 = arith.constant 0 : index
    %c0_3 = arith.constant 0 : index
    %4 = vector.load %arg2[%c0_2, %c0_3] : memref<16x32xf32, #tpu.memory_space<vmem>>, vector<16x32xf32>
    %c0_4 = arith.constant 0 : index
    %c0_5 = arith.constant 0 : index
    %5 = vector.load %arg3[%c0_4, %c0_5] : memref<32x128xf32, #tpu.memory_space<vmem>>, vector<32x128xf32>
    %cst = arith.constant dense<0.000000e+00> : vector<16x128xf32>
    %6 = tpu.matmul %4, %5, %cst {dimension_numbers = #tpu.dot_dimension_numbers<[1], [0], [0], [1], [0, 0, 1, 1], [], []>} : vector<16x32xf32>, vector<32x128xf32>, vector<16x128xf32> -> vector<16x128xf32>
    %7 = arith.addf %3, %6 : vector<16x128xf32>
    %c0_6 = arith.constant 0 : index
    %c0_7 = arith.constant 0 : index
    %8 = vector.load %arg10[%c0_6, %c0_7] : memref<16x128xf32, #tpu.memory_space<vmem>>, vector<16x128xf32>
    tpu.vector_store %arg10[%c0_6, %c0_7], %7 {strides = array<i32>} : memref<16x128xf32, #tpu.memory_space<vmem>>, vector<16x128xf32>,
    %c0_i32_8 = arith.constant 0 : i32
    %9 = arith.cmpi eq, %arg1, %c0_i32_8 : i32
    %10 = arith.extui %9 : i1 to i32
    %c0_i32_9 = arith.constant 0 : i32
    %11 = arith.cmpi ne, %10, %c0_i32_9 : i32
    scf.if %11 {
      %c0_10 = arith.constant 0 : index
      %c0_11 = arith.constant 0 : index
      %12 = vector.load %arg10[%c0_10, %c0_11] : memref<16x128xf32, #tpu.memory_space<vmem>>, vector<16x128xf32>
      %c0_12 = arith.constant 0 : index
      %c0_13 = arith.constant 0 : index
      %13 = vector.load %arg4[%c0_12, %c0_13] : memref<1x128xf32, #tpu.memory_space<vmem>>, vector<1x128xf32>
      %14 = vector.broadcast %13 : vector<1x128xf32> to vector<16x128xf32>
      %15 = arith.addf %12, %14 : vector<16x128xf32>
      %cst_14 = arith.constant 0.000000e+00 : f32
      %16 = vector.broadcast %cst_14 : f32 to vector<16x128xf32>
      %17 = arith.maximumf %15, %16 : vector<16x128xf32>
      %c0_15 = arith.constant 0 : index
      %c0_16 = arith.constant 0 : index
      %18 = vector.load %arg5[%c0_15, %c0_16] : memref<128x128xf32, #tpu.memory_space<vmem>>, vector<128x128xf32>
      %cst_17 = arith.constant dense<0.000000e+00> : vector<16x128xf32>
      %19 = tpu.matmul %17, %18, %cst_17 {dimension_numbers = #tpu.dot_dimension_numbers<[1], [0], [0], [1], [0, 0, 1, 1], [], []>} : vector<16x128xf32>, vector<128x128xf32>, vector<16x128xf32> -> vector<16x128xf32>
      %c0_18 = arith.constant 0 : index
      %c0_19 = arith.constant 0 : index
      %20 = vector.load %arg6[%c0_18, %c0_19] : memref<1x128xf32, #tpu.memory_space<vmem>>, vector<1x128xf32>
      %21 = vector.broadcast %20 : vector<1x128xf32> to vector<16x128xf32>
      %22 = arith.addf %19, %21 : vector<16x128xf32>
      %cst_20 = arith.constant 0.000000e+00 : f32
      %23 = vector.broadcast %cst_20 : f32 to vector<16x128xf32>
      %24 = arith.maximumf %22, %23 : vector<16x128xf32>
      %c0_21 = arith.constant 0 : index
      %c0_22 = arith.constant 0 : index
      %25 = vector.load %arg7[%c0_21, %c0_22] : memref<1x128xf32, #tpu.memory_space<vmem>>, vector<1x128xf32>
      %cst_23 = arith.constant dense<0.000000e+00> : vector<1x16xf32>
      %26 = tpu.matmul %25, %24, %cst_23 {dimension_numbers = #tpu.dot_dimension_numbers<[1], [1], [0], [0], [0, 0, 1, 0], [], []>} : vector<1x128xf32>, vector<16x128xf32>, vector<1x16xf32> -> vector<1x16xf32>
      %c0_24 = arith.constant 0 : index
      %27 = memref.load %arg8[%c0_24] : memref<1xf32, #tpu.memory_space<smem>>
      %28 = vector.broadcast %27 : f32 to vector<1x16xf32>
      %29 = arith.addf %26, %28 : vector<1x16xf32>
      %30 = arith.negf %29 : vector<1x16xf32>
      %31 = math.exp %30 : vector<1x16xf32>
      %cst_25 = arith.constant 1.000000e+00 : f32
      %32 = vector.broadcast %cst_25 : f32 to vector<1x16xf32>
      %33 = arith.addf %32, %31 : vector<1x16xf32>
      %34 = arith.divf %32, %33 : vector<1x16xf32>
      %c0_26 = arith.constant 0 : index
      %c0_27 = arith.constant 0 : index
      %35 = vector.load %arg9[%c0_26, %c0_27] : memref<1x16xf32, #tpu.memory_space<vmem>>, vector<1x16xf32>
      tpu.vector_store %arg9[%c0_26, %c0_27], %34 {strides = array<i32>} : memref<1x16xf32, #tpu.memory_space<vmem>>, vector<1x16xf32>,
    } else {
    }
    return
  }
  func.func @transform_0(%arg0: i32, %arg1: i32) -> (i32, i32) {
    %c0_i32 = arith.constant 0 : i32
    return %arg0, %arg1 : i32, i32
  }
  func.func @transform_1(%arg0: i32, %arg1: i32) -> (i32, i32) {
    %c0_i32 = arith.constant 0 : i32
    %c0_i32_0 = arith.constant 0 : i32
    return %arg1, %c0_i32 : i32, i32
  }
  func.func @transform_2(%arg0: i32, %arg1: i32) -> (i32, i32) {
    %c0_i32 = arith.constant 0 : i32
    %c0_i32_0 = arith.constant 0 : i32
    %c0_i32_1 = arith.constant 0 : i32
    return %c0_i32, %c0_i32_0 : i32, i32
  }
  func.func @transform_3(%arg0: i32, %arg1: i32) -> (i32, i32) {
    %c0_i32 = arith.constant 0 : i32
    %c0_i32_0 = arith.constant 0 : i32
    %c0_i32_1 = arith.constant 0 : i32
    return %c0_i32, %c0_i32_0 : i32, i32
  }
  func.func @transform_4(%arg0: i32, %arg1: i32) -> (i32, i32) {
    %c0_i32 = arith.constant 0 : i32
    %c0_i32_0 = arith.constant 0 : i32
    %c0_i32_1 = arith.constant 0 : i32
    return %c0_i32, %c0_i32_0 : i32, i32
  }
  func.func @transform_5(%arg0: i32, %arg1: i32) -> (i32, i32) {
    %c0_i32 = arith.constant 0 : i32
    %c0_i32_0 = arith.constant 0 : i32
    %c0_i32_1 = arith.constant 0 : i32
    return %c0_i32, %c0_i32_0 : i32, i32
  }
  func.func @transform_6(%arg0: i32, %arg1: i32) -> i32 {
    %c0_i32 = arith.constant 0 : i32
    %c0_i32_0 = arith.constant 0 : i32
    return %c0_i32 : i32
  }
  func.func @transform_7(%arg0: i32, %arg1: i32) -> (i32, i32) {
    %c0_i32 = arith.constant 0 : i32
    %c0_i32_0 = arith.constant 0 : i32
    return %c0_i32, %arg0 : i32, i32
  }
}

</mosaic_0001>

<llo_original>
// kernel: tpu_custom_call.1
$region0: #{tpu_custom_call.1}
  #allocation0 [shape = 'u32[]', space=smem, size = 0x4, offset = 0x4, fixed_abs, tag = 'smem constant byte address 0x4 - core index']
  #allocation1 [shape = 'u32[72,128]{1,0:T(1,128)}', space=vmem, size = 0x9000, scoped, tag = 'internal scratch']
  #allocation2 [shape = 'f32[16,128]{1,0:T(8,128)}', space=vmem, size = 0x2000, scoped, tag = 'scratch operand']
  #allocation3 [shape = 'f32[1]{0:T(128)S(6)}', space=smem, size = 0x200, scoped, tag = 'scoped memory for tpu_custom_call.1']
  %s0 = inlined_call_operand.hbm [shape: f32[16,32], index: 0, kind: input, shape index: {}]
  %s1 = inlined_call_operand.hbm [shape: f32[32,128], index: 1, kind: input, shape index: {}]
  %s2 = inlined_call_operand.vmem [shape: f32[1,128], index: 2, kind: input, shape index: {}]
  %s3 = inlined_call_operand.hbm [shape: f32[128,128], index: 3, kind: input, shape index: {}]
  %s4 = inlined_call_operand.vmem [shape: f32[1,128], index: 4, kind: input, shape index: {}]
  %s5 = inlined_call_operand.vmem [shape: f32[1,128], index: 5, kind: input, shape index: {}]
  %s6 = inlined_call_operand.<no memory space> [shape: f32[1], index: 6, kind: input, shape index: {}]
  %s7 = inlined_call_operand.hbm [shape: f32[1,16], index: 7, kind: output, shape index: {}]
  %s8 = sld [smem:[#allocation0]]
  $region58: #{tpu_custom_call.1} parent=0
    _
  %s10 = ssub.s32 1, %s8
  %s11 = scalar_select 0, %s10, %s8
  %12 = sst [smem:[#allocation3]] %s6
  $region1: #{tpu_custom_call.1} parent=0
    #allocation4 [shape = 'u8[8192]{0}', space=vmem, size = 0x2000, scoped, tag = 'input window, operand 0, single buffered']
    #allocation5 [shape = 's32[1]{0}', space=sflag, size = 0x4, scoped, tag = 'scoped memory for tpu_custom_call.1']
    #allocation6 [shape = 's32[1]{0}', space=sflag, size = 0x4, scoped, tag = 'scoped memory for tpu_custom_call.1']
    #allocation7 [shape = 'u8[16384]{0}', space=vmem, size = 0x4000, scoped, tag = 'input window, operand 1, single buffered']
    #allocation8 [shape = 's32[1]{0}', space=sflag, size = 0x4, scoped, tag = 'scoped memory for tpu_custom_call.1']
    #allocation9 [shape = 'u8[65536]{0}', space=vmem, size = 0x10000, scoped, tag = 'input window, operand 3, single buffered']
    #allocation10 [shape = 'u8[512]{0}', space=vmem, size = 0x400, scoped, tag = 'output window, operand 0, single buffered']
    %13 = vsyncpa [#allocation5], 0
    %14 = vsyncpa [#allocation8], 0
    %15 = vsyncpa [#allocation6], 0
    // Predicated region
    $region2: #{tpu_custom_call.1} parent=1 // pred_check
      _
    $region3: #{tpu_custom_call.1} parent=1 // pred_check_branch
      %17 = sbr.rel (0) target = $region5
    $region4: #{tpu_custom_call.1} parent=1 // pred_region
      %19 = vsyncadd [#allocation5], 0
      %s20 = sshll.u32 %s0, 4
      %s21 = int_to_ptr.hbm [resolvable:$true] %s20
      %s22 = sshll.u32 [#allocation4], 4
      %s23 = int_to_ptr.vmem [resolvable:$true] %s22
      %28 = dma.hbm_to_vmem [thread:$0]  %s21, 256, %s23, [#allocation5], 128, 128, 8
    $region5: #{tpu_custom_call.1} parent=1 // pred_fallthru
      _
    // Predicated region
    $region6: #{tpu_custom_call.1} parent=1 // pred_check
      _
    $region7: #{tpu_custom_call.1} parent=1 // pred_check_branch
      %30 = sbr.rel (0) target = $region9
    $region8: #{tpu_custom_call.1} parent=1 // pred_region
      %32 = vsyncadd [#allocation8], 0
      %s33 = sshll.u32 %s1, 4
      %s34 = int_to_ptr.hbm [resolvable:$true] %s33
      %s35 = sshll.u32 [#allocation7], 4
      %s36 = int_to_ptr.vmem [resolvable:$true] %s35
      %41 = dma.hbm_to_vmem [thread:$0]  %s34, 512, %s36, [#allocation8], 128, 128, 8
    $region9: #{tpu_custom_call.1} parent=1 // pred_fallthru
      _
    // Predicated region
    $region10: #{tpu_custom_call.1} parent=1 // pred_check
      _
    $region11: #{tpu_custom_call.1} parent=1 // pred_check_branch
      %43 = sbr.rel (0) target = $region13
    $region12: #{tpu_custom_call.1} parent=1 // pred_region
      _
    $region13: #{tpu_custom_call.1} parent=1 // pred_fallthru
      _
    // Predicated region
    $region14: #{tpu_custom_call.1} parent=1 // pred_check
      _
    $region15: #{tpu_custom_call.1} parent=1 // pred_check_branch
      %45 = sbr.rel (0) target = $region17
    $region16: #{tpu_custom_call.1} parent=1 // pred_region
      %47 = vsyncadd [#allocation8], 0
      %s48 = sshll.u32 %s3, 4
      %s49 = int_to_ptr.hbm [resolvable:$true] %s48
      %s50 = sshll.u32 [#allocation9], 4
      %s51 = int_to_ptr.vmem [resolvable:$true] %s50
      %56 = dma.hbm_to_vmem [thread:$0]  %s49, 2048, %s51, [#allocation8], 128, 128, 8
    $region17: #{tpu_custom_call.1} parent=1 // pred_fallthru
      _
    // Predicated region
    $region18: #{tpu_custom_call.1} parent=1 // pred_check
      _
    $region19: #{tpu_custom_call.1} parent=1 // pred_check_branch
      %58 = sbr.rel (0) target = $region21
    $region20: #{tpu_custom_call.1} parent=1 // pred_region
      _
    $region21: #{tpu_custom_call.1} parent=1 // pred_fallthru
      _
    // Predicated region
    $region22: #{tpu_custom_call.1} parent=1 // pred_check
      _
    $region23: #{tpu_custom_call.1} parent=1 // pred_check_branch
      %60 = sbr.rel (0) target = $region25
    $region24: #{tpu_custom_call.1} parent=1 // pred_region
      _
    $region25: #{tpu_custom_call.1} parent=1 // pred_fallthru
      _
    // Predicated region
    $region26: #{tpu_custom_call.1} parent=1 // pred_check
      _
    $region27: #{tpu_custom_call.1} parent=1 // pred_check_branch
      %62 = sbr.rel (0) target = $region29
    $region28: #{tpu_custom_call.1} parent=1 // pred_region
      _
    $region29: #{tpu_custom_call.1} parent=1 // pred_fallthru
      _
    // Predicated region
    $region30: #{tpu_custom_call.1} parent=1 // pred_check
      _
    $region31: #{tpu_custom_call.1} parent=1 // pred_check_branch
      %64 = sbr.rel (0) target = $region33
    $region32: #{tpu_custom_call.1} parent=1 // pred_region
      %66 = dma.done [#allocation5], 256
    $region33: #{tpu_custom_call.1} parent=1 // pred_fallthru
      _
    // Predicated region
    $region34: #{tpu_custom_call.1} parent=1 // pred_check
      _
    $region35: #{tpu_custom_call.1} parent=1 // pred_check_branch
      %68 = sbr.rel (0) target = $region37
    $region36: #{tpu_custom_call.1} parent=1 // pred_region
      %70 = dma.done [#allocation8], 512
    $region37: #{tpu_custom_call.1} parent=1 // pred_fallthru
      _
    // Predicated region
    $region38: #{tpu_custom_call.1} parent=1 // pred_check
      _
    $region39: #{tpu_custom_call.1} parent=1 // pred_check_branch
      %72 = sbr.rel (0) target = $region41
    $region40: #{tpu_custom_call.1} parent=1 // pred_region
      %74 = dma.done [#allocation8], 2048
    $region41: #{tpu_custom_call.1} parent=1 // pred_fallthru
      _
    %p75 = scmp.eq.s32.totalorder 0, 0
    // Predicated region
    $region42: #{tpu_custom_call.1} parent=1 // pred_check
      %p76 = pneg %p75
    $region43: #{tpu_custom_call.1} parent=1 // pred_check_branch
      %78 = sbr.rel (%p76) target = $region45
    $region44: #{tpu_custom_call.1} parent=1 // pred_region
      %79 = vst [vmem:[#allocation2] sm:$0xff] 0.0
      %80 = vst [vmem:[#allocation2 + $0x8] sm:$0xff] 0.0
    $region45: #{tpu_custom_call.1} parent=1 // pred_fallthru
      _
    %v81 = vld [vmem:[#allocation2] sm:$0xff]
    %v82 = vld [vmem:[#allocation2 + $0x8] sm:$0xff]
    %v83 = vld [vmem:[#allocation4] sm:$0xff]
    %v84 = vld [vmem:[#allocation4 + $0x8] sm:$0xff]
    %v85 = vld [vmem:[#allocation7] sm:$0xff]
    %v86 = vld [vmem:[#allocation7 + $0x8] sm:$0xff]
    %v87 = vld [vmem:[#allocation7 + $0x10] sm:$0xff]
    %v88 = vld [vmem:[#allocation7 + $0x18] sm:$0xff]
    %vm89 = vcmask 261120
    %v91 = vsel %vm89, %v83, 0
    %v94 = vsel %vm89, %v84, 0
    %96 = vmatpush.msra.mxu0 0.0
    %97 = vmatpush.msra.mxu0 0.0
    %98 = vmatpush.msra.mxu0 0.0
    %99 = vmatpush.msra.mxu0 0.0
    %100 = vmatpush.msra.mxu0 0.0
    %101 = vmatpush.msra.mxu0 0.0
    %102 = vmatpush.msra.mxu0 0.0
    %103 = vmatpush.msra.mxu0 0.0
    %104 = vmatpush.msra.mxu0 0.0
    %105 = vmatpush.msra.mxu0 0.0
    %106 = vmatpush.msra.mxu0 0.0
    %107 = vmatpush.msra.mxu0 0.0
    %108 = vmatpush.msra.mxu0 %v88
    %109 = vmatpush.msra.mxu0 %v87
    %110 = vmatpush.msra.mxu0 %v86
    %111 = vmatpush.msra.mxu0 %v85
    %112 = vmatmul.f32.gmra.mxu0 %v91
    %v113 = vpop.f32.mrf.mxu0
    %v114 = vadd.f32 0.0, %v113
    %115 = vmatmul.f32.gmra.mxu0 %v94
    %v116 = vpop.f32.mrf.mxu0
    %v117 = vadd.f32 0.0, %v116
    %118 = vdwg.mxu0
    %v119 = vadd.f32 %v81, %v114
    %v120 = vadd.f32 %v82, %v117
    %121 = vst [vmem:[#allocation2] sm:$0xff] %v119
    %122 = vst [vmem:[#allocation2 + $0x8] sm:$0xff] %v120
    // Predicated region
    $region46: #{tpu_custom_call.1} parent=1 // pred_check
      %p123 = pneg %p75
    $region47: #{tpu_custom_call.1} parent=1 // pred_check_branch
      %125 = sbr.rel (%p123) target = $region49
    $region48: #{tpu_custom_call.1} parent=1 // pred_region
      %v126 = vld [vmem:[#allocation2] sm:$0xff]
      %v127 = vld [vmem:[#allocation2 + $0x8] sm:$0xff]
      %v128 = vld [vmem:[%s2] sm:$0x1]
      %v130 = vperm.slane %v128, 0
      %v132 = vadd.f32 %v126, %v130
      %v133 = vadd.f32 %v127, %v130
      %v134 = vmax.f32 %v132, 0.0
      %v135 = vmax.f32 %v133, 0.0
      %v136 = vld [vmem:[#allocation9] sm:$0xff]
      %v137 = vld [vmem:[#allocation9 + $0x8] sm:$0xff]
      %v138 = vld [vmem:[#allocation9 + $0x10] sm:$0xff]
      %v139 = vld [vmem:[#allocation9 + $0x18] sm:$0xff]
      %v140 = vld [vmem:[#allocation9 + $0x20] sm:$0xff]
      %v141 = vld [vmem:[#allocation9 + $0x28] sm:$0xff]
      %v142 = vld [vmem:[#allocation9 + $0x30] sm:$0xff]
      %v143 = vld [vmem:[#allocation9 + $0x38] sm:$0xff]
      %v144 = vld [vmem:[#allocation9 + $0x40] sm:$0xff]
      %v145 = vld [vmem:[#allocation9 + $0x48] sm:$0xff]
      %v146 = vld [vmem:[#allocation9 + $0x50] sm:$0xff]
      %v147 = vld [vmem:[#allocation9 + $0x58] sm:$0xff]
      %v148 = vld [vmem:[#allocation9 + $0x60] sm:$0xff]
      %v149 = vld [vmem:[#allocation9 + $0x68] sm:$0xff]
      %v150 = vld [vmem:[#allocation9 + $0x70] sm:$0xff]
      %v151 = vld [vmem:[#allocation9 + $0x78] sm:$0xff]
      %v152 = vld [vmem:[%s4] sm:$0x1]
      %v154 = vperm.slane %v152, 0
      %156 = vmatpush.msra.mxu0 %v151
      %157 = vmatpush.msra.mxu0 %v150
      %158 = vmatpush.msra.mxu0 %v149
      %159 = vmatpush.msra.mxu0 %v148
      %160 = vmatpush.msra.mxu0 %v147
      %161 = vmatpush.msra.mxu0 %v146
      %162 = vmatpush.msra.mxu0 %v145
      %163 = vmatpush.msra.mxu0 %v144
      %164 = vmatpush.msra.mxu0 %v143
      %165 = vmatpush.msra.mxu0 %v142
      %166 = vmatpush.msra.mxu0 %v141
      %167 = vmatpush.msra.mxu0 %v140
      %168 = vmatpush.msra.mxu0 %v139
      %169 = vmatpush.msra.mxu0 %v138
      %170 = vmatpush.msra.mxu0 %v137
      %171 = vmatpush.msra.mxu0 %v136
      %172 = vmatmul.f32.gmra.mxu0 %v134
      %v173 = vpop.f32.mrf.mxu0
      %v174 = vadd.f32 %v154, %v173
      %175 = vmatmul.f32.gmra.mxu0 %v135
      %v176 = vpop.f32.mrf.mxu0
      %v177 = vadd.f32 %v154, %v176
      %178 = vdwg.mxu0
      %v179 = vmax.f32 %v174, 0.0
      %v180 = vmax.f32 %v177, 0.0
      %v181 = vld [vmem:[%s5] sm:$0x1]
      %s182 = sld [smem:[#allocation3]]
      %v183 = vstv %s182
      %184 = vmatpush.xpose.msra.mxu0 0.0
      %185 = vmatpush.xpose.msra.mxu0 0.0
      %186 = vmatpush.xpose.msra.mxu0 0.0
      %187 = vmatpush.xpose.msra.mxu0 0.0
      %188 = vmatpush.xpose.msra.mxu0 0.0
      %189 = vmatpush.xpose.msra.mxu0 0.0
      %190 = vmatpush.xpose.msra.mxu0 0.0
      %191 = vmatpush.xpose.msra.mxu0 0.0
      %192 = vmatpush.xpose.msra.mxu0 0.0
      %193 = vmatpush.xpose.msra.mxu0 0.0
      %194 = vmatpush.xpose.msra.mxu0 0.0
      %195 = vmatpush.xpose.msra.mxu0 0.0
      %196 = vmatpush.xpose.msra.mxu0 0.0
      %197 = vmatpush.xpose.msra.mxu0 0.0
      %198 = vmatpush.xpose.msra.mxu0 %v180
      %199 = vmatpush.xpose.msra.mxu0 %v179
      %200 = vmatmul.f32.gmra.mxu0 %v181
      %v201 = vpop.f32.mrf.mxu0
      %v202 = vadd.f32 %v183, %v201
      %203 = vdwg.mxu0
      %v204 = vxor.u32 %v202, 2147483648
      %v205 = vmul.f32 %v204, 1.442695
      %v206 = vpow.pop %v205
      %v207 = vadd.f32 %v206, 1.0
      %v208 = vrcp.pop %v207
      %v209 = vmul.f32 %v207, %v208
      %v210 = vsub.f32 1.0, %v209
      %v211 = vmul.f32 %v208, %v210
      %v212 = vadd.f32 %v208, %v211
      %vm213 = vweird.f32 %v207
      %vm214 = vweird.f32 %v208
      %vm215 = vmor %vm213, %vm214
      %v216 = vsel %vm215, %v208, %v212
      %v217 = vand.u32 2147483647, %v207
      %vm218 = vcmp.eq.f32.partialorder %v217, 8.507059e+37
      %v219 = vand.u32 %v207, 2147483648
      %v220 = vor.u32 1.1754944e-38, %v219
      %v221 = vsel %vm218, %v220, %v216
      %v222 = vmul.f32 1.0, %v221
      %vm223 = vcmask 122880
      %224 = vst.msk [vmem:[#allocation10] sm:$0x1] %vm223, %v222
    $region49: #{tpu_custom_call.1} parent=1 // pred_fallthru
      _
    // Predicated region
    $region50: #{tpu_custom_call.1} parent=1 // pred_check
      _
    $region51: #{tpu_custom_call.1} parent=1 // pred_check_branch
      %226 = sbr.rel (0) target = $region53
    $region52: #{tpu_custom_call.1} parent=1 // pred_region
      %228 = vsyncadd [#allocation6], 0
      %s230 = sshll.u32 [#allocation10], 4
      %s231 = int_to_ptr.vmem [resolvable:$true] %s230
      %s232 = sshll.u32 %s7, 4
      %s233 = int_to_ptr.hbm [resolvable:$true] %s232
      %235 = dma.vmem_to_hbm [thread:$0]  %s231, 16, %s233, [#allocation6]
    $region53: #{tpu_custom_call.1} parent=1 // pred_fallthru
      _
    // Predicated region
    $region54: #{tpu_custom_call.1} parent=1 // pred_check
      _
    $region55: #{tpu_custom_call.1} parent=1 // pred_check_branch
      %237 = sbr.rel (0) target = $region57
    $region56: #{tpu_custom_call.1} parent=1 // pred_region
      %239 = dma.done [#allocation6], 16
    $region57: #{tpu_custom_call.1} parent=1 // pred_fallthru
      _
    %240 = vsyncpa [#allocation5], 1
    %241 = vsyncpa [#allocation8], 1
    %242 = vsyncpa [#allocation6], 1

// kernel: tpu_custom_call.1
$region0: #{tpu_custom_call.1}
  #allocation0 [shape = 'u32[]', space=smem, size = 0x4, offset = 0x4, fixed_abs, tag = 'smem constant byte address 0x4 - core index']
  #allocation1 [shape = 'u32[72,128]{1,0:T(1,128)}', space=vmem, size = 0x9000, scoped, tag = 'internal scratch']
  #allocation2 [shape = 'f32[16,128]{1,0:T(8,128)}', space=vmem, size = 0x2000, scoped, tag = 'scratch operand']
  #allocation3 [shape = 'f32[1]{0:T(128)S(6)}', space=smem, size = 0x200, scoped, tag = 'scoped memory for tpu_custom_call.1']
  %s0 = inlined_call_operand.hbm [shape: f32[16,32], index: 0, kind: input, shape index: {}]
  %s1 = inlined_call_operand.hbm [shape: f32[32,128], index: 1, kind: input, shape index: {}]
  %s2 = inlined_call_operand.vmem [shape: f32[1,128], index: 2, kind: input, shape index: {}]
  %s3 = inlined_call_operand.hbm [shape: f32[128,128], index: 3, kind: input, shape index: {}]
  %s4 = inlined_call_operand.vmem [shape: f32[1,128], index: 4, kind: input, shape index: {}]
  %s5 = inlined_call_operand.vmem [shape: f32[1,128], index: 5, kind: input, shape index: {}]
  %s6 = inlined_call_operand.<no memory space> [shape: f32[1], index: 6, kind: input, shape index: {}]
  %s7 = inlined_call_operand.hbm [shape: f32[1,16], index: 7, kind: output, shape index: {}]
  %s8 = sld [smem:[#allocation0]]
  $region58: #{tpu_custom_call.1} parent=0
    _
  %s10 = ssub.s32 1, %s8
  %s11 = scalar_select 0, %s10, %s8
  %12 = sst [smem:[#allocation3]] %s6
  $region1: #{tpu_custom_call.1} parent=0
    #allocation4 [shape = 'u8[8192]{0}', space=vmem, size = 0x2000, scoped, tag = 'input window, operand 0, single buffered']
    #allocation5 [shape = 's32[1]{0}', space=sflag, size = 0x4, scoped, tag = 'scoped memory for tpu_custom_call.1']
    #allocation6 [shape = 's32[1]{0}', space=sflag, size = 0x4, scoped, tag = 'scoped memory for tpu_custom_call.1']
    #allocation7 [shape = 'u8[16384]{0}', space=vmem, size = 0x4000, scoped, tag = 'input window, operand 1, single buffered']
    #allocation8 [shape = 's32[1]{0}', space=sflag, size = 0x4, scoped, tag = 'scoped memory for tpu_custom_call.1']
    #allocation9 [shape = 'u8[65536]{0}', space=vmem, size = 0x10000, scoped, tag = 'input window, operand 3, single buffered']
    #allocation10 [shape = 'u8[512]{0}', space=vmem, size = 0x400, scoped, tag = 'output window, operand 0, single buffered']
    %13 = vsyncpa [#allocation5], 0
    %14 = vsyncpa [#allocation8], 0
    %15 = vsyncpa [#allocation6], 0
    // Predicated region
    $region2: #{tpu_custom_call.1} parent=1 // pred_check
      _
    $region3: #{tpu_custom_call.1} parent=1 // pred_check_branch
      %17 = sbr.rel (0) target = $region5
    $region4: #{tpu_custom_call.1} parent=1 // pred_region
      %19 = vsyncadd [#allocation5], 0
      %s20 = sshll.u32 %s0, 4
      %s21 = int_to_ptr.hbm [resolvable:$true] %s20
      %s22 = sshll.u32 [#allocation4], 4
      %s23 = int_to_ptr.vmem [resolvable:$true] %s22
      %28 = dma.hbm_to_vmem [thread:$0]  %s21, 256, %s23, [#allocation5], 128, 128, 8
    $region5: #{tpu_custom_call.1} parent=1 // pred_fallthru
      _
    // Predicated region
    $region6: #{tpu_custom_call.1} parent=1 // pred_check
      _
    $region7: #{tpu_custom_call.1} parent=1 // pred_check_branch
      %30 = sbr.rel (0) target = $region9
    $region8: #{tpu_custom_call.1} parent=1 // pred_region
      %32 = vsyncadd [#allocation8], 0
      %s33 = sshll.u32 %s1, 4
      %s34 = int_to_ptr.hbm [resolvable:$true] %s33
      %s35 = sshll.u32 [#allocation7], 4
      %s36 = int_to_ptr.vmem [resolvable:$true] %s35
      %41 = dma.hbm_to_vmem [thread:$0]  %s34, 512, %s36, [#allocation8], 128, 128, 8
    $region9: #{tpu_custom_call.1} parent=1 // pred_fallthru
      _
    // Predicated region
    $region10: #{tpu_custom_call.1} parent=1 // pred_check
      _
    $region11: #{tpu_custom_call.1} parent=1 // pred_check_branch
      %43 = sbr.rel (0) target = $region13
    $region12: #{tpu_custom_call.1} parent=1 // pred_region
      _
    $region13: #{tpu_custom_call.1} parent=1 // pred_fallthru
      _
    // Predicated region
    $region14: #{tpu_custom_call.1} parent=1 // pred_check
      _
    $region15: #{tpu_custom_call.1} parent=1 // pred_check_branch
      %45 = sbr.rel (0) target = $region17
    $region16: #{tpu_custom_call.1} parent=1 // pred_region
      %47 = vsyncadd [#allocation8], 0
      %s48 = sshll.u32 %s3, 4
      %s49 = int_to_ptr.hbm [resolvable:$true] %s48
      %s50 = sshll.u32 [#allocation9], 4
      %s51 = int_to_ptr.vmem [resolvable:$true] %s50
      %56 = dma.hbm_to_vmem [thread:$0]  %s49, 2048, %s51, [#allocation8], 128, 128, 8
    $region17: #{tpu_custom_call.1} parent=1 // pred_fallthru
      _
    // Predicated region
    $region18: #{tpu_custom_call.1} parent=1 // pred_check
      _
    $region19: #{tpu_custom_call.1} parent=1 // pred_check_branch
      %58 = sbr.rel (0) target = $region21
    $region20: #{tpu_custom_call.1} parent=1 // pred_region
      _
    $region21: #{tpu_custom_call.1} parent=1 // pred_fallthru
      _
    // Predicated region
    $region22: #{tpu_custom_call.1} parent=1 // pred_check
      _
    $region23: #{tpu_custom_call.1} parent=1 // pred_check_branch
      %60 = sbr.rel (0) target = $region25
    $region24: #{tpu_custom_call.1} parent=1 // pred_region
      _
    $region25: #{tpu_custom_call.1} parent=1 // pred_fallthru
      _
    // Predicated region
    $region26: #{tpu_custom_call.1} parent=1 // pred_check
      _
    $region27: #{tpu_custom_call.1} parent=1 // pred_check_branch
      %62 = sbr.rel (0) target = $region29
    $region28: #{tpu_custom_call.1} parent=1 // pred_region
      _
    $region29: #{tpu_custom_call.1} parent=1 // pred_fallthru
      _
    // Predicated region
    $region30: #{tpu_custom_call.1} parent=1 // pred_check
      _
    $region31: #{tpu_custom_call.1} parent=1 // pred_check_branch
      %64 = sbr.rel (0) target = $region33
    $region32: #{tpu_custom_call.1} parent=1 // pred_region
      %66 = dma.done [#allocation5], 256
    $region33: #{tpu_custom_call.1} parent=1 // pred_fallthru
      _
    // Predicated region
    $region34: #{tpu_custom_call.1} parent=1 // pred_check
      _
    $region35: #{tpu_custom_call.1} parent=1 // pred_check_branch
      %68 = sbr.rel (0) target = $region37
    $region36: #{tpu_custom_call.1} parent=1 // pred_region
      %70 = dma.done [#allocation8], 512
    $region37: #{tpu_custom_call.1} parent=1 // pred_fallthru
      _
    // Predicated region
    $region38: #{tpu_custom_call.1} parent=1 // pred_check
      _
    $region39: #{tpu_custom_call.1} parent=1 // pred_check_branch
      %72 = sbr.rel (0) target = $region41
    $region40: #{tpu_custom_call.1} parent=1 // pred_region
      %74 = dma.done [#allocation8], 2048
    $region41: #{tpu_custom_call.1} parent=1 // pred_fallthru
      _
    %p75 = scmp.eq.s32.totalorder 0, 0
    // Predicated region
    $region42: #{tpu_custom_call.1} parent=1 // pred_check
      %p76 = pneg %p75
    $region43: #{tpu_custom_call.1} parent=1 // pred_check_branch
      %78 = sbr.rel (%p76) target = $region45
    $region44: #{tpu_custom_call.1} parent=1 // pred_region
      %79 = vst [vmem:[#allocation2] sm:$0xff] 0.0
      %80 = vst [vmem:[#allocation2 + $0x8] sm:$0xff] 0.0
    $region45: #{tpu_custom_call.1} parent=1 // pred_fallthru
      _
    %v81 = vld [vmem:[#allocation2] sm:$0xff]
    %v82 = vld [vmem:[#allocation2 + $0x8] sm:$0xff]
    %v83 = vld [vmem:[#allocation4] sm:$0xff]
    %v84 = vld [vmem:[#allocation4 + $0x8] sm:$0xff]
    %v85 = vld [vmem:[#allocation7] sm:$0xff]
    %v86 = vld [vmem:[#allocation7 + $0x8] sm:$0xff]
    %v87 = vld [vmem:[#allocation7 + $0x10] sm:$0xff]
    %v88 = vld [vmem:[#allocation7 + $0x18] sm:$0xff]
    %vm89 = vcmask 261120
    %v91 = vsel %vm89, %v83, 0
    %v94 = vsel %vm89, %v84, 0
    %96 = vmatpush.msra.mxu0 0.0
    %97 = vmatpush.msra.mxu0 0.0
    %98 = vmatpush.msra.mxu0 0.0
    %99 = vmatpush.msra.mxu0 0.0
    %100 = vmatpush.msra.mxu0 0.0
    %101 = vmatpush.msra.mxu0 0.0
    %102 = vmatpush.msra.mxu0 0.0
    %103 = vmatpush.msra.mxu0 0.0
    %104 = vmatpush.msra.mxu0 0.0
    %105 = vmatpush.msra.mxu0 0.0
    %106 = vmatpush.msra.mxu0 0.0
    %107 = vmatpush.msra.mxu0 0.0
    %108 = vmatpush.msra.mxu0 %v88
    %109 = vmatpush.msra.mxu0 %v87
    %110 = vmatpush.msra.mxu0 %v86
    %111 = vmatpush.msra.mxu0 %v85
    %112 = vmatmul.f32.gmra.mxu0 %v91
    %v113 = vpop.f32.mrf.mxu0
    %v114 = vadd.f32 0.0, %v113
    %115 = vmatmul.f32.gmra.mxu0 %v94
    %v116 = vpop.f32.mrf.mxu0
    %v117 = vadd.f32 0.0, %v116
    %118 = vdwg.mxu0
    %v119 = vadd.f32 %v81, %v114
    %v120 = vadd.f32 %v82, %v117
    %121 = vst [vmem:[#allocation2] sm:$0xff] %v119
    %122 = vst [vmem:[#allocation2 + $0x8] sm:$0xff] %v120
    // Predicated region
    $region46: #{tpu_custom_call.1} parent=1 // pred_check
      %p123 = pneg %p75
    $region47: #{tpu_custom_call.1} parent=1 // pred_check_branch
      %125 = sbr.rel (%p123) target = $region49
    $region48: #{tpu_custom_call.1} parent=1 // pred_region
      %v126 = vld [vmem:[#allocation2] sm:$0xff]
      %v127 = vld [vmem:[#allocation2 + $0x8] sm:$0xff]
      %v128 = vld [vmem:[%s2] sm:$0x1]
      %v130 = vperm.slane %v128, 0
      %v132 = vadd.f32 %v126, %v130
      %v133 = vadd.f32 %v127, %v130
      %v134 = vmax.f32 %v132, 0.0
      %v135 = vmax.f32 %v133, 0.0
      %v136 = vld [vmem:[#allocation9] sm:$0xff]
      %v137 = vld [vmem:[#allocation9 + $0x8] sm:$0xff]
      %v138 = vld [vmem:[#allocation9 + $0x10] sm:$0xff]
      %v139 = vld [vmem:[#allocation9 + $0x18] sm:$0xff]
      %v140 = vld [vmem:[#allocation9 + $0x20] sm:$0xff]
      %v141 = vld [vmem:[#allocation9 + $0x28] sm:$0xff]
      %v142 = vld [vmem:[#allocation9 + $0x30] sm:$0xff]
      %v143 = vld [vmem:[#allocation9 + $0x38] sm:$0xff]
      %v144 = vld [vmem:[#allocation9 + $0x40] sm:$0xff]
      %v145 = vld [vmem:[#allocation9 + $0x48] sm:$0xff]
      %v146 = vld [vmem:[#allocation9 + $0x50] sm:$0xff]
      %v147 = vld [vmem:[#allocation9 + $0x58] sm:$0xff]
      %v148 = vld [vmem:[#allocation9 + $0x60] sm:$0xff]
      %v149 = vld [vmem:[#allocation9 + $0x68] sm:$0xff]
      %v150 = vld [vmem:[#allocation9 + $0x70] sm:$0xff]
      %v151 = vld [vmem:[#allocation9 + $0x78] sm:$0xff]
      %v152 = vld [vmem:[%s4] sm:$0x1]
      %v154 = vperm.slane %v152, 0
      %156 = vmatpush.msra.mxu0 %v151
      %157 = vmatpush.msra.mxu0 %v150
      %158 = vmatpush.msra.mxu0 %v149
      %159 = vmatpush.msra.mxu0 %v148
      %160 = vmatpush.msra.mxu0 %v147
      %161 = vmatpush.msra.mxu0 %v146
      %162 = vmatpush.msra.mxu0 %v145
      %163 = vmatpush.msra.mxu0 %v144
      %164 = vmatpush.msra.mxu0 %v143
      %165 = vmatpush.msra.mxu0 %v142
      %166 = vmatpush.msra.mxu0 %v141
      %167 = vmatpush.msra.mxu0 %v140
      %168 = vmatpush.msra.mxu0 %v139
      %169 = vmatpush.msra.mxu0 %v138
      %170 = vmatpush.msra.mxu0 %v137
      %171 = vmatpush.msra.mxu0 %v136
      %172 = vmatmul.f32.gmra.mxu0 %v134
      %v173 = vpop.f32.mrf.mxu0
      %v174 = vadd.f32 %v154, %v173
      %175 = vmatmul.f32.gmra.mxu0 %v135
      %v176 = vpop.f32.mrf.mxu0
      %v177 = vadd.f32 %v154, %v176
      %178 = vdwg.mxu0
      %v179 = vmax.f32 %v174, 0.0
      %v180 = vmax.f32 %v177, 0.0
      %v181 = vld [vmem:[%s5] sm:$0x1]
      %s182 = sld [smem:[#allocation3]]
      %v183 = vstv %s182
      %184 = vmatpush.xpose.msra.mxu0 0.0
      %185 = vmatpush.xpose.msra.mxu0 0.0
      %186 = vmatpush.xpose.msra.mxu0 0.0
      %187 = vmatpush.xpose.msra.mxu0 0.0
      %188 = vmatpush.xpose.msra.mxu0 0.0
      %189 = vmatpush.xpose.msra.mxu0 0.0
      %190 = vmatpush.xpose.msra.mxu0 0.0
      %191 = vmatpush.xpose.msra.mxu0 0.0
      %192 = vmatpush.xpose.msra.mxu0 0.0
      %193 = vmatpush.xpose.msra.mxu0 0.0
      %194 = vmatpush.xpose.msra.mxu0 0.0
      %195 = vmatpush.xpose.msra.mxu0 0.0
      %196 = vmatpush.xpose.msra.mxu0 0.0
      %197 = vmatpush.xpose.msra.mxu0 0.0
      %198 = vmatpush.xpose.msra.mxu0 %v180
      %199 = vmatpush.xpose.msra.mxu0 %v179
      %200 = vmatmul.f32.gmra.mxu0 %v181
      %v201 = vpop.f32.mrf.mxu0
      %v202 = vadd.f32 %v183, %v201
      %203 = vdwg.mxu0
      %v204 = vxor.u32 %v202, 2147483648
      %v205 = vmul.f32 %v204, 1.442695
      %v206 = vpow.pop %v205
      %v207 = vadd.f32 %v206, 1.0
      %v208 = vrcp.pop %v207
      %v209 = vmul.f32 %v207, %v208
      %v210 = vsub.f32 1.0, %v209
      %v211 = vmul.f32 %v208, %v210
      %v212 = vadd.f32 %v208, %v211
      %vm213 = vweird.f32 %v207
      %vm214 = vweird.f32 %v208
      %vm215 = vmor %vm213, %vm214
      %v216 = vsel %vm215, %v208, %v212
      %v217 = vand.u32 2147483647, %v207
      %vm218 = vcmp.eq.f32.partialorder %v217, 8.507059e+37
      %v219 = vand.u32 %v207, 2147483648
      %v220 = vor.u32 1.1754944e-38, %v219
      %v221 = vsel %vm218, %v220, %v216
      %v222 = vmul.f32 1.0, %v221
      %vm223 = vcmask 122880
      %224 = vst.msk [vmem:[#allocation10] sm:$0x1] %vm223, %v222
    $region49: #{tpu_custom_call.1} parent=1 // pred_fallthru
      _
    // Predicated region
    $region50: #{tpu_custom_call.1} parent=1 // pred_check
      _
    $region51: #{tpu_custom_call.1} parent=1 // pred_check_branch
      %226 = sbr.rel (0) target = $region53
    $region52: #{tpu_custom_call.1} parent=1 // pred_region
      %228 = vsyncadd [#allocation6], 0
      %s230 = sshll.u32 [#allocation10], 4
      %s231 = int_to_ptr.vmem [resolvable:$true] %s230
      %s232 = sshll.u32 %s7, 4
      %s233 = int_to_ptr.hbm [resolvable:$true] %s232
      %235 = dma.vmem_to_hbm [thread:$0]  %s231, 16, %s233, [#allocation6]
    $region53: #{tpu_custom_call.1} parent=1 // pred_fallthru
      _
    // Predicated region
    $region54: #{tpu_custom_call.1} parent=1 // pred_check
      _
    $region55: #{tpu_custom_call.1} parent=1 // pred_check_branch
      %237 = sbr.rel (0) target = $region57
    $region56: #{tpu_custom_call.1} parent=1 // pred_region
      %239 = dma.done [#allocation6], 16
    $region57: #{tpu_custom_call.1} parent=1 // pred_fallthru
      _
    %240 = vsyncpa [#allocation5], 1
    %241 = vsyncpa [#allocation8], 1
    %242 = vsyncpa [#allocation6], 1

</llo_original>
